<compile_context>
chip_gen: v6e
topology: v6e:2x2x1
jax: 0.10.0
libtpu: 0.0.40
codegen_flags: <defaults>
</compile_context>

<pallas_src>
import jax
import jax.numpy as jnp
from jax.experimental import pallas as pl
from jax.experimental.pallas import tpu as pltpu

AVG_DIM = (1.61057209, 1.47745965, 3.52359498)

# --- tiling constants -------------------------------------------------------
_MAX_TN = 131072      # predict_and_eval lane tile: 40*TN B HBM/step (~5.1 MB), ~16 MiB padded
                      # double-buffered VMEM -> fits v5e/v6e/v7x with headroom.
_FWD_W = 3072         # forward lane width: multiple of 384 = lcm(3,128) so the [h,w,l] pattern
                      # repeats exactly per row and lanes stay dense.
_FWD_MAX_TM = 256     # 256x3072 f32 block = 3 MiB -> ~6 MiB HBM per grid step (read+write).


def _round_up(x, m):
    return ((x + m - 1) // m) * m


def _tile_and_pad(n, tile_n=None, max_tn=_MAX_TN):
    """Lane tile TN (multiple of 128) and padded N for the (*, N) layout."""
    n128 = _round_up(max(n, 1), 128)
    if tile_n is not None:
        tn = _round_up(tile_n, 128)
    else:
        tn = min(max_tn, n128)
        # Keep the grid >= 2 when possible so the "parallel" axis shards across v7x's 2 TCs.
        if tn == n128 and n128 >= 256:
            tn = max(128, (n128 // 2 // 128) * 128)
    n_pad = _round_up(n128, tn)
    return tn, n_pad


def _row_tile(m, tile_m=None, max_tm=_FWD_MAX_TM):
    """Sublane (row) tile TM (multiple of 8) and padded row count for the forward layout."""
    m8 = _round_up(max(m, 1), 8)
    if tile_m is not None:
        tm = _round_up(tile_m, 8)
    else:
        tm = min(max_tm, m8)
        if tm == m8 and m8 >= 16:     # keep grid >= 2 when there is enough work (v7x megacore)
            tm = max(8, (m8 // 2 // 8) * 8)
    m_pad = _round_up(m8, tm)
    return tm, m_pad


def _vmem_limit_bytes(est):
    """Scoped-VMEM request: estimate + headroom, capped for v7x's 64 MiB physical VMEM."""
    return int(min(max(est + (8 << 20), 16 << 20), 44 << 20))


# ---------------------------------------------------------------------------
# Kernels
# ---------------------------------------------------------------------------
def _forward_kernel(avg_ref, x_ref, o_ref):
    # avg_ref: (1, W) f32   -- [h,w,l,h,w,l,...] tiled avg pattern (W multiple of 384)
    # x_ref/o_ref: (TM, W)  -- row-major flattened (N,3) values; no transpose anywhere
    x = x_ref[...].astype(jnp.float32)
    o_ref[...] = (x + avg_ref[...]).astype(o_ref.dtype)   # single full-tile store


def _predict_eval_kernel(avg_ref, x_ref, o_ref):
    # avg_ref: (3, 1) f32   -- per-dim offsets, lane-broadcast to (3, TN)
    # x_ref:   (6, TN) f32  -- rows 0:3 = value^T, rows 3:6 = label^T (merged DMA stream)
    # o_ref:   (4, TN) f32  -- rows 0:3 = pred^T, row 3 = Aligned IoU (merged DMA stream)
    x = x_ref[...]
    v = x[0:3, :]
    lab = x[3:6, :]

    pred = v + avg_ref[...]                 # (3, TN) full-tile add
    c = jnp.maximum(pred, 0.0)              # clamp predicted dims at 0 (matches reference)
    inter = jnp.minimum(c, lab)

    inter_vol = inter[0:1, :] * inter[1:2, :] * inter[2:3, :]
    pred_vol = c[0:1, :] * c[1:2, :] * c[2:3, :]
    label_vol = lab[0:1, :] * lab[1:2, :] * lab[2:3, :]

    # No epsilon, to match the PyTorch reference exactly.  Padded lanes get label = 1.0 in the
    # wrapper so the denominator there is strictly positive.
    denom = pred_vol + label_vol - inter_vol
    iou = inter_vol * pl.reciprocal(denom)  # exact reciprocal; EUP slot, free while HBM-bound

    o_ref[0:3, :] = pred
    o_ref[3:4, :] = iou


# ---------------------------------------------------------------------------
# Wrappers
# ---------------------------------------------------------------------------
def _aligned_iou_3d_ref(pred, label):
    pred = jnp.maximum(pred.astype(jnp.float32), 0.0)
    label = label.astype(jnp.float32)
    inter = jnp.minimum(pred, label)
    inter_vol = inter[:, 0] * inter[:, 1] * inter[:, 2]
    pred_vol = pred[:, 0] * pred[:, 1] * pred[:, 2]
    label_vol = label[:, 0] * label[:, 1] * label[:, 2]
    return inter_vol / (pred_vol + label_vol - inter_vol)


def dimension_predictor_forward(value, avg_dim, *, tile_m=None,
                                min_pallas_n=8192, force_pallas=False):
    value = jnp.asarray(value)
    n, d = value.shape
    assert d == 3
    avg = jnp.asarray(avg_dim, dtype=jnp.float32).reshape(3)

    # Tiny-N fast path: one fused XLA broadcast-add beats any kernel launch.
    if n < min_pallas_n and not force_pallas:
        return value + avg.astype(value.dtype)

    W = _FWD_W
    total = 3 * n
    m = -(-total // W)
    tm, m_pad = _row_tile(m, tile_m)

    # Row-major flatten is free; only the tail pad costs anything (elided when already aligned).
    flat = jnp.pad(value.reshape(-1), (0, m_pad * W - total))
    x2d = flat.reshape(m_pad, W)
    avg_row = jnp.tile(avg, W // 3).reshape(1, W)       # [a0,a1,a2,a0,a1,a2,...]

    itemsize = jnp.dtype(value.dtype).itemsize
    est = 4 * tm * W * itemsize + 2 * 8 * W * 4          # 2x-buffered in+out, padded avg row

    out2d = pl.pallas_call(
        _forward_kernel,
        out_shape=jax.ShapeDtypeStruct((m_pad, W), value.dtype),
        grid=(m_pad // tm,),
        in_specs=[
            pl.BlockSpec((1, W), lambda i: (0, 0)),       # avg pattern (resident, re-used)
            pl.BlockSpec((tm, W), lambda i: (i, 0)),
        ],
        out_specs=pl.BlockSpec((tm, W), lambda i: (i, 0)),
        compiler_params=pltpu.CompilerParams(
            dimension_semantics=("parallel",),
            vmem_limit_bytes=_vmem_limit_bytes(est)),
    )(avg_row, x2d)

    return out2d.reshape(-1)[:total].reshape(n, 3)


def dimension_predictor_predict_and_eval(value, label, avg_dim, *, tile_n=None,
                                         min_pallas_n=100_000, force_pallas=False):
    value = jnp.asarray(value)
    label = jnp.asarray(label)
    n, d = value.shape
    assert d == 3 and label.shape == (n, 3)
    avg = jnp.asarray(avg_dim, dtype=jnp.float32).reshape(3)

    # Below ~1e5 boxes the wrapper transpose passes dominate; use the fused XLA path.
    if n < min_pallas_n and not force_pallas:
        pred = value + avg.astype(value.dtype)
        return pred, _aligned_iou_3d_ref(pred, label)

    tn, n_pad = _tile_and_pad(n, tile_n)
    pad = n_pad - n

    # Merged lane-dense input (one DMA stream): rows 0:3 = value^T (padded with 0),
    # rows 3:6 = label^T (padded with 1.0 so padded-lane IoU never hits 0/0).
    vt = jnp.pad(value.astype(jnp.float32).T, ((0, 0), (0, pad)))
    lt = jnp.pad(label.astype(jnp.float32).T, ((0, 0), (0, pad)), constant_values=1.0)
    x6 = jnp.concatenate([vt, lt], axis=0)               # (6, n_pad)
    avg_col = avg.reshape(3, 1)

    # Padded (8-sublane) double-buffered VMEM footprint: input + output, f32.
    est = 2 * (8 * tn * 4) + 2 * (8 * tn * 4)

    out4 = pl.pallas_call(
        _predict_eval_kernel,
        out_shape=jax.ShapeDtypeStruct((4, n_pad), jnp.float32),  # rows 0:3 pred^T, row 3 IoU
        grid=(n_pad // tn,),
        in_specs=[
            pl.BlockSpec((3, 1), lambda i: (0, 0)),       # avg column (resident, re-used)
            pl.BlockSpec((6, tn), lambda i: (0, i)),      # merged value/label tile
        ],
        out_specs=pl.BlockSpec((4, tn), lambda i: (0, i)),
        compiler_params=pltpu.CompilerParams(
            dimension_semantics=("parallel",),
            vmem_limit_bytes=_vmem_limit_bytes(est)),
    )(avg_col, x6)

    # TODO(synk): if the consumer can accept the (3/4, N) transposed layout end-to-end, return
    # out4 directly and skip this slice/transpose-back HBM pass.
    pred = out4[0:3, :n].T.astype(value.dtype)
    iou = out4[3, :n]
    return pred, iou


# ---------------------------------------------------------------------------
# Demo / correctness check
# ---------------------------------------------------------------------------
if __name__ == "__main__":
    key = jax.random.PRNGKey(0)
    k1, k2, k3, k4, k5, k6 = jax.random.split(key, 6)
    avg_dim = jnp.asarray(AVG_DIM, dtype=jnp.float32)

    def check_case(value, label, **kw):
        pred_ref = value + avg_dim
        iou_ref = _aligned_iou_3d_ref(pred_ref, label)

        p_fwd = jax.block_until_ready(
            dimension_predictor_forward(value, avg_dim, force_pallas=True, **{
                k: v for k, v in kw.items() if k == "tile_m"}))
        assert jnp.allclose(p_fwd, pred_ref, atol=1e-6, rtol=1e-6)

        p, iou = dimension_predictor_predict_and_eval(
            value, label, avg_dim, force_pallas=True, **{
                k: v for k, v in kw.items() if k == "tile_n"})
        p = jax.block_until_ready(p)
        iou = jax.block_until_ready(iou)
        assert jnp.allclose(p, pred_ref, atol=1e-6, rtol=1e-6)
        assert jnp.allclose(iou, iou_ref, atol=1e-5, rtol=1e-5)
        return pred_ref, iou_ref

    # --- Case 1: tiny N (module-typical), single grid step ---
    n1 = 8
    value1 = jax.random.normal(k1, (n1, 3), dtype=jnp.float32) * 0.5
    label1 = jax.random.uniform(k2, (n1, 3), dtype=jnp.float32, minval=1.0, maxval=4.0)
    pred1_ref, iou1_ref = check_case(value1, label1)

    # --- Case 2: N not a multiple of 128, multi-step grid (padding + pipelining) ---
    n2 = 300
    value2 = jax.random.normal(k3, (n2, 3), dtype=jnp.float32) * 0.5
    label2 = jax.random.uniform(k4, (n2, 3), dtype=jnp.float32, minval=1.0, maxval=4.0)
    check_case(value2, label2, tile_n=128)

    # --- Case 3: default tiling path; grid auto-split so both v7x TCs get work ---
    n3 = 4096
    value3 = jax.random.normal(k5, (n3, 3), dtype=jnp.float32) * 0.5
    label3 = jax.random.uniform(k6, (n3, 3), dtype=jnp.float32, minval=1.0, maxval=4.0)
    check_case(value3, label3)

    # --- Case 4: small-N fast path (pure JAX, no kernel launch) ---
    p4, iou4 = dimension_predictor_predict_and_eval(value1, label1, avg_dim)
    p4 = jax.block_until_ready(p4)
    iou4 = jax.block_until_ready(iou4)
    assert jnp.allclose(p4, pred1_ref, atol=1e-6, rtol=1e-6)
    assert jnp.allclose(iou4, iou1_ref, atol=1e-5, rtol=1e-5)

    print("KERNEL_OK")
</pallas_src>

<mosaic_0001>
module attributes {stable_mosaic.version = 11 : i64} {
  func.func @_forward_kernel(%arg0: i32, %arg1: memref<1x3072xf32, #tpu.memory_space<vmem>>, %arg2: memref<8x3072xf32, #tpu.memory_space<vmem>>, %arg3: memref<8x3072xf32, #tpu.memory_space<vmem>>) attributes {dimension_semantics = [#tpu.dimension_semantics<parallel>], iteration_bounds = array<i64: 1>, scalar_prefetch = 0 : i64, scratch_operands = 0 : i64, tpu.core_type = #tpu.core_type<tc>, window_params = [{pipeline_mode = #tpu.pipeline_mode<synchronous>, transform_indices = @transform_0, window_bounds = array<i64: 1, 3072>}, {transform_indices = @transform_1, window_bounds = array<i64: 8, 3072>}, {transform_indices = @transform_2, window_bounds = array<i64: 8, 3072>}]} {
    %c0 = arith.constant 0 : index
    %c0_0 = arith.constant 0 : index
    %0 = vector.load %arg2[%c0, %c0_0] : memref<8x3072xf32, #tpu.memory_space<vmem>>, vector<8x3072xf32>
    %c0_1 = arith.constant 0 : index
    %c0_2 = arith.constant 0 : index
    %1 = vector.load %arg1[%c0_1, %c0_2] : memref<1x3072xf32, #tpu.memory_space<vmem>>, vector<1x3072xf32>
    %2 = vector.broadcast %1 : vector<1x3072xf32> to vector<8x3072xf32>
    %3 = arith.addf %0, %2 : vector<8x3072xf32>
    %c0_3 = arith.constant 0 : index
    %c0_4 = arith.constant 0 : index
    %4 = vector.load %arg3[%c0_3, %c0_4] : memref<8x3072xf32, #tpu.memory_space<vmem>>, vector<8x3072xf32>
    tpu.vector_store %arg3[%c0_3, %c0_4], %3 {strides = array<i32>} : memref<8x3072xf32, #tpu.memory_space<vmem>>, vector<8x3072xf32>,
    return
  }
  func.func @transform_0(%arg0: i32) -> (i32, i32) {
    %c0_i32 = arith.constant 0 : i32
    %c0_i32_0 = arith.constant 0 : i32
    %c0_i32_1 = arith.constant 0 : i32
    return %c0_i32, %c0_i32_0 : i32, i32
  }
  func.func @transform_1(%arg0: i32) -> (i32, i32) {
    %c0_i32 = arith.constant 0 : i32
    %c0_i32_0 = arith.constant 0 : i32
    return %arg0, %c0_i32 : i32, i32
  }
  func.func @transform_2(%arg0: i32) -> (i32, i32) {
    %c0_i32 = arith.constant 0 : i32
    %c0_i32_0 = arith.constant 0 : i32
    return %arg0, %c0_i32 : i32, i32
  }
}

</mosaic_0001>

<llo_original>
// kernel: tpu_custom_call.1
$region0: #{tpu_custom_call.1}
  #allocation0 [shape = 'u32[]', space=smem, size = 0x4, offset = 0x4, fixed_abs, tag = 'smem constant byte address 0x4 - core index']
  #allocation1 [shape = 'u32[144,128]{1,0:T(1,128)}', space=vmem, size = 0x12000, scoped, tag = 'internal scratch']
  %s0 = inlined_call_operand.hbm [shape: f32[1,3072], index: 0, kind: input, shape index: {}]
  %s1 = inlined_call_operand.hbm [shape: f32[8,3072], index: 1, kind: input, shape index: {}]
  %s2 = inlined_call_operand.hbm [shape: f32[8,3072], index: 2, kind: output, shape index: {}]
  %s3 = sld [smem:[#allocation0]]
  $region26: #{tpu_custom_call.1} parent=0
    _
  %s5 = ssub.s32 1, %s3
  %s6 = scalar_select 0, %s5, %s3
  $region1: #{tpu_custom_call.1} parent=0
    #allocation2 [shape = 'u8[12288]{0}', space=vmem, size = 0x3000, scoped, tag = 'input window, operand 0, single buffered']
    #allocation3 [shape = 's32[1]{0}', space=sflag, size = 0x4, scoped, tag = 'scoped memory for tpu_custom_call.1']
    #allocation4 [shape = 's32[1]{0}', space=sflag, size = 0x4, scoped, tag = 'scoped memory for tpu_custom_call.1']
    #allocation5 [shape = 'u8[98304]{0}', space=vmem, size = 0x18000, scoped, tag = 'input window, operand 1, single buffered']
    #allocation6 [shape = 's32[1]{0}', space=sflag, size = 0x4, scoped, tag = 'scoped memory for tpu_custom_call.1']
    #allocation7 [shape = 'u8[98304]{0}', space=vmem, size = 0x18000, scoped, tag = 'output window, operand 0, single buffered']
    %7 = vsyncpa [#allocation3], 0
    %8 = vsyncpa [#allocation6], 0
    %9 = vsyncpa [#allocation4], 0
    // Predicated region
    $region2: #{tpu_custom_call.1} parent=1 // pred_check
      _
    $region3: #{tpu_custom_call.1} parent=1 // pred_check_branch
      %11 = sbr.rel (0) target = $region5
    $region4: #{tpu_custom_call.1} parent=1 // pred_region
      %s13 = ssub.s32 384, 384
      %14 = vsyncadd [#allocation3], %s13
      %s16 = sshll.u32 [#allocation2], 4
      %s17 = int_to_ptr.vmem [resolvable:$true] %s16
      %19 = dma.hbm_to_vmem [thread:$0]  %s0, 384, %s17, [#allocation3]
    $region5: #{tpu_custom_call.1} parent=1 // pred_fallthru
      _
    // Predicated region
    $region6: #{tpu_custom_call.1} parent=1 // pred_check
      _
    $region7: #{tpu_custom_call.1} parent=1 // pred_check_branch
      %21 = sbr.rel (0) target = $region9
    $region8: #{tpu_custom_call.1} parent=1 // pred_region
      %s23 = ssub.s32 3072, 3072
      %24 = vsyncadd [#allocation6], %s23
      %s26 = sshll.u32 [#allocation5], 4
      %s27 = int_to_ptr.vmem [resolvable:$true] %s26
      %29 = dma.hbm_to_vmem [thread:$0]  %s1, 3072, %s27, [#allocation6]
    $region9: #{tpu_custom_call.1} parent=1 // pred_fallthru
      _
    // Predicated region
    $region10: #{tpu_custom_call.1} parent=1 // pred_check
      _
    $region11: #{tpu_custom_call.1} parent=1 // pred_check_branch
      %31 = sbr.rel (0) target = $region13
    $region12: #{tpu_custom_call.1} parent=1 // pred_region
      %32 = dma.done [#allocation3], 384
    $region13: #{tpu_custom_call.1} parent=1 // pred_fallthru
      _
    // Predicated region
    $region14: #{tpu_custom_call.1} parent=1 // pred_check
      _
    $region15: #{tpu_custom_call.1} parent=1 // pred_check_branch
      %34 = sbr.rel (0) target = $region17
    $region16: #{tpu_custom_call.1} parent=1 // pred_region
      %35 = dma.done [#allocation6], 3072
    $region17: #{tpu_custom_call.1} parent=1 // pred_fallthru
      _
    %v36 = vld [vmem:[#allocation5] sm:$0xff]
    %v37 = vld [vmem:[#allocation5 + $0x8] sm:$0xff]
    %v38 = vld [vmem:[#allocation5 + $0x10] sm:$0xff]
    %v39 = vld [vmem:[#allocation5 + $0x18] sm:$0xff]
    %v40 = vld [vmem:[#allocation5 + $0x20] sm:$0xff]
    %v41 = vld [vmem:[#allocation5 + $0x28] sm:$0xff]
    %v42 = vld [vmem:[#allocation5 + $0x30] sm:$0xff]
    %v43 = vld [vmem:[#allocation5 + $0x38] sm:$0xff]
    %v44 = vld [vmem:[#allocation5 + $0x40] sm:$0xff]
    %v45 = vld [vmem:[#allocation5 + $0x48] sm:$0xff]
    %v46 = vld [vmem:[#allocation5 + $0x50] sm:$0xff]
    %v47 = vld [vmem:[#allocation5 + $0x58] sm:$0xff]
    %v48 = vld [vmem:[#allocation5 + $0x60] sm:$0xff]
    %v49 = vld [vmem:[#allocation5 + $0x68] sm:$0xff]
    %v50 = vld [vmem:[#allocation5 + $0x70] sm:$0xff]
    %v51 = vld [vmem:[#allocation5 + $0x78] sm:$0xff]
    %v52 = vld [vmem:[#allocation5 + $0x80] sm:$0xff]
    %v53 = vld [vmem:[#allocation5 + $0x88] sm:$0xff]
    %v54 = vld [vmem:[#allocation5 + $0x90] sm:$0xff]
    %v55 = vld [vmem:[#allocation5 + $0x98] sm:$0xff]
    %v56 = vld [vmem:[#allocation5 + $0xa0] sm:$0xff]
    %v57 = vld [vmem:[#allocation5 + $0xa8] sm:$0xff]
    %v58 = vld [vmem:[#allocation5 + $0xb0] sm:$0xff]
    %v59 = vld [vmem:[#allocation5 + $0xb8] sm:$0xff]
    %v60 = vld [vmem:[#allocation2] sm:$0xff]
    %v61 = vld [vmem:[#allocation2 + $0x8] sm:$0xff]
    %v62 = vld [vmem:[#allocation2 + $0x10] sm:$0xff]
    %v66 = vlaneseq
    %v67 = vshrl.u32 %v66, 7
    %v68 = vsub.s32 0, %v67
    %v69 = vrot.slane %v60, %v68
    %v70 = vlaneseq
    %v71 = vshrl.u32 %v70, 7
    %v72 = vsub.s32 1, %v71
    %v73 = vrot.slane %v60, %v72
    %v74 = vlaneseq
    %v75 = vshrl.u32 %v74, 7
    %v76 = vsub.s32 2, %v75
    %v77 = vrot.slane %v60, %v76
    %v78 = vlaneseq
    %v79 = vshrl.u32 %v78, 7
    %v80 = vsub.s32 3, %v79
    %v81 = vrot.slane %v60, %v80
    %v82 = vlaneseq
    %v83 = vshrl.u32 %v82, 7
    %v84 = vsub.s32 4, %v83
    %v85 = vrot.slane %v60, %v84
    %v86 = vlaneseq
    %v87 = vshrl.u32 %v86, 7
    %v88 = vsub.s32 5, %v87
    %v89 = vrot.slane %v60, %v88
    %v90 = vlaneseq
    %v91 = vshrl.u32 %v90, 7
    %v92 = vsub.s32 6, %v91
    %v93 = vrot.slane %v60, %v92
    %v94 = vlaneseq
    %v95 = vshrl.u32 %v94, 7
    %v96 = vsub.s32 7, %v95
    %v97 = vrot.slane %v60, %v96
    %v98 = vlaneseq
    %v99 = vshrl.u32 %v98, 7
    %v100 = vsub.s32 0, %v99
    %v101 = vrot.slane %v61, %v100
    %v102 = vlaneseq
    %v103 = vshrl.u32 %v102, 7
    %v104 = vsub.s32 1, %v103
    %v105 = vrot.slane %v61, %v104
    %v106 = vlaneseq
    %v107 = vshrl.u32 %v106, 7
    %v108 = vsub.s32 2, %v107
    %v109 = vrot.slane %v61, %v108
    %v110 = vlaneseq
    %v111 = vshrl.u32 %v110, 7
    %v112 = vsub.s32 3, %v111
    %v113 = vrot.slane %v61, %v112
    %v114 = vlaneseq
    %v115 = vshrl.u32 %v114, 7
    %v116 = vsub.s32 4, %v115
    %v117 = vrot.slane %v61, %v116
    %v118 = vlaneseq
    %v119 = vshrl.u32 %v118, 7
    %v120 = vsub.s32 5, %v119
    %v121 = vrot.slane %v61, %v120
    %v122 = vlaneseq
    %v123 = vshrl.u32 %v122, 7
    %v124 = vsub.s32 6, %v123
    %v125 = vrot.slane %v61, %v124
    %v126 = vlaneseq
    %v127 = vshrl.u32 %v126, 7
    %v128 = vsub.s32 7, %v127
    %v129 = vrot.slane %v61, %v128
    %v130 = vlaneseq
    %v131 = vshrl.u32 %v130, 7
    %v132 = vsub.s32 0, %v131
    %v133 = vrot.slane %v62, %v132
    %v134 = vlaneseq
    %v135 = vshrl.u32 %v134, 7
    %v136 = vsub.s32 1, %v135
    %v137 = vrot.slane %v62, %v136
    %v138 = vlaneseq
    %v139 = vshrl.u32 %v138, 7
    %v140 = vsub.s32 2, %v139
    %v141 = vrot.slane %v62, %v140
    %v142 = vlaneseq
    %v143 = vshrl.u32 %v142, 7
    %v144 = vsub.s32 3, %v143
    %v145 = vrot.slane %v62, %v144
    %v146 = vlaneseq
    %v147 = vshrl.u32 %v146, 7
    %v148 = vsub.s32 4, %v147
    %v149 = vrot.slane %v62, %v148
    %v150 = vlaneseq
    %v151 = vshrl.u32 %v150, 7
    %v152 = vsub.s32 5, %v151
    %v153 = vrot.slane %v62, %v152
    %v154 = vlaneseq
    %v155 = vshrl.u32 %v154, 7
    %v156 = vsub.s32 6, %v155
    %v157 = vrot.slane %v62, %v156
    %v158 = vlaneseq
    %v159 = vshrl.u32 %v158, 7
    %v160 = vsub.s32 7, %v159
    %v161 = vrot.slane %v62, %v160
    %v186 = vadd.f32 %v36, %v69
    %v187 = vadd.f32 %v37, %v73
    %v188 = vadd.f32 %v38, %v77
    %v189 = vadd.f32 %v39, %v81
    %v190 = vadd.f32 %v40, %v85
    %v191 = vadd.f32 %v41, %v89
    %v192 = vadd.f32 %v42, %v93
    %v193 = vadd.f32 %v43, %v97
    %v194 = vadd.f32 %v44, %v101
    %v195 = vadd.f32 %v45, %v105
    %v196 = vadd.f32 %v46, %v109
    %v197 = vadd.f32 %v47, %v113
    %v198 = vadd.f32 %v48, %v117
    %v199 = vadd.f32 %v49, %v121
    %v200 = vadd.f32 %v50, %v125
    %v201 = vadd.f32 %v51, %v129
    %v202 = vadd.f32 %v52, %v133
    %v203 = vadd.f32 %v53, %v137
    %v204 = vadd.f32 %v54, %v141
    %v205 = vadd.f32 %v55, %v145
    %v206 = vadd.f32 %v56, %v149
    %v207 = vadd.f32 %v57, %v153
    %v208 = vadd.f32 %v58, %v157
    %v209 = vadd.f32 %v59, %v161
    %210 = vst [vmem:[#allocation7] sm:$0xff] %v186
    %211 = vst [vmem:[#allocation7 + $0x8] sm:$0xff] %v187
    %212 = vst [vmem:[#allocation7 + $0x10] sm:$0xff] %v188
    %213 = vst [vmem:[#allocation7 + $0x18] sm:$0xff] %v189
    %214 = vst [vmem:[#allocation7 + $0x20] sm:$0xff] %v190
    %215 = vst [vmem:[#allocation7 + $0x28] sm:$0xff] %v191
    %216 = vst [vmem:[#allocation7 + $0x30] sm:$0xff] %v192
    %217 = vst [vmem:[#allocation7 + $0x38] sm:$0xff] %v193
    %218 = vst [vmem:[#allocation7 + $0x40] sm:$0xff] %v194
    %219 = vst [vmem:[#allocation7 + $0x48] sm:$0xff] %v195
    %220 = vst [vmem:[#allocation7 + $0x50] sm:$0xff] %v196
    %221 = vst [vmem:[#allocation7 + $0x58] sm:$0xff] %v197
    %222 = vst [vmem:[#allocation7 + $0x60] sm:$0xff] %v198
    %223 = vst [vmem:[#allocation7 + $0x68] sm:$0xff] %v199
    %224 = vst [vmem:[#allocation7 + $0x70] sm:$0xff] %v200
    %225 = vst [vmem:[#allocation7 + $0x78] sm:$0xff] %v201
    %226 = vst [vmem:[#allocation7 + $0x80] sm:$0xff] %v202
    %227 = vst [vmem:[#allocation7 + $0x88] sm:$0xff] %v203
    %228 = vst [vmem:[#allocation7 + $0x90] sm:$0xff] %v204
    %229 = vst [vmem:[#allocation7 + $0x98] sm:$0xff] %v205
    %230 = vst [vmem:[#allocation7 + $0xa0] sm:$0xff] %v206
    %231 = vst [vmem:[#allocation7 + $0xa8] sm:$0xff] %v207
    %232 = vst [vmem:[#allocation7 + $0xb0] sm:$0xff] %v208
    %233 = vst [vmem:[#allocation7 + $0xb8] sm:$0xff] %v209
    // Predicated region
    $region18: #{tpu_custom_call.1} parent=1 // pred_check
      _
    $region19: #{tpu_custom_call.1} parent=1 // pred_check_branch
      %235 = sbr.rel (0) target = $region21
    $region20: #{tpu_custom_call.1} parent=1 // pred_region
      %s237 = ssub.s32 3072, 3072
      %238 = vsyncadd [#allocation4], %s237
      %s240 = sshll.u32 [#allocation7], 4
      %s241 = int_to_ptr.vmem [resolvable:$true] %s240
      %243 = dma.vmem_to_hbm [thread:$0]  %s241, 3072, %s2, [#allocation4]
    $region21: #{tpu_custom_call.1} parent=1 // pred_fallthru
      _
    // Predicated region
    $region22: #{tpu_custom_call.1} parent=1 // pred_check
      _
    $region23: #{tpu_custom_call.1} parent=1 // pred_check_branch
      %245 = sbr.rel (0) target = $region25
    $region24: #{tpu_custom_call.1} parent=1 // pred_region
      %246 = dma.done [#allocation4], 3072
    $region25: #{tpu_custom_call.1} parent=1 // pred_fallthru
      _
    %247 = vsyncpa [#allocation3], 1
    %248 = vsyncpa [#allocation6], 1
    %249 = vsyncpa [#allocation4], 1

</llo_original>
